<compile_context>
chip_gen: v7x
topology: tpu7x:2x2x1
jax: 0.10.0
libtpu: 0.0.40
codegen_flags: <defaults>
</compile_context>

<pallas_src>
import jax
import jax.numpy as jnp
from jax.experimental import pallas as pl
from jax.experimental.pallas import tpu as pltpu


def _round_up(x, m):
    return (x + m - 1) // m * m


def _vision_embed_kernel(p_ref, w_ref, add_ref, o_ref):
    # p_ref:   (ts, K_pad)    bf16  patch rows for one image tile
    #                               (seq row 0 of each image is zeros -> cls slot)
    # w_ref:   (K_pad, N_pad) bf16  projection weight
    # add_ref: (ts, N_pad)    f32   per-seq-position additive epilogue
    # o_ref:   (ts, N_pad)          output tile
    acc = jnp.dot(p_ref[...], w_ref[...], preferred_element_type=jnp.float32)
    o_ref[...] = (acc + add_ref[...]).astype(o_ref.dtype)


def make_vision_embedding(weight, bias, cls_token, pos_emb, patch_size):
    """Returns a jitted forward(x) implementing VisionEmbedding (eval mode).

    weight:    (hidden, C, P, P)   nn.Conv2d weight
    bias:      (hidden,)           nn.Conv2d bias
    cls_token: (1, 1, hidden)
    pos_emb:   (1, num_patches + 1, hidden)
    """
    hidden, C, P, _ = weight.shape
    assert P == patch_size
    K = C * P * P
    S = pos_emb.shape[1]            # num_patches + 1
    num_patches = S - 1

    # ---- one-time (hoisted) parameter prep ----
    K_pad = _round_up(K, 128)
    N_pad = _round_up(hidden, 128)
    # One sequence tile per image when the sequence is short; tile it otherwise.
    if S <= 1024:
        ts = _round_up(S, 8)
        S_pad = ts
    else:
        ts = 512
        S_pad = _round_up(S, ts)
    s_blocks = S_pad // ts

    # (hidden, C, P, P) -> (K_pad, N_pad); (c, kh, kw) flatten order matches the
    # patch flatten order below and nn.Conv2d's weight layout.
    w2 = weight.reshape(hidden, K).T
    w2 = jnp.pad(w2, ((0, K_pad - K), (0, N_pad - hidden))).astype(jnp.bfloat16)

    # Fused epilogue term: row 0 = cls + pos[0] (no conv bias on the cls slot);
    # rows s >= 1 = conv bias + pos[s].
    pos2 = pos_emb.reshape(S, hidden).astype(jnp.float32)
    row0 = cls_token.reshape(hidden).astype(jnp.float32) + pos2[0]
    rows = bias.astype(jnp.float32)[None, :] + pos2[1:]
    add = jnp.concatenate([row0[None, :], rows], axis=0)
    add = jnp.pad(add, ((0, S_pad - S), (0, N_pad - hidden)))

    def forward(x):
        B, Cx, H, W = x.shape
        hp, wp = H // P, W // P
        assert Cx * P * P == K and hp * wp == num_patches

        # ---- patch extraction glue (one XLA transpose, cast to bf16) ----
        patches = x.reshape(B, Cx, hp, P, wp, P)
        patches = patches.transpose(0, 2, 4, 1, 3, 5).reshape(B, num_patches, K)
        patches = patches.astype(jnp.bfloat16)
        # Prepend a zero row per image (cls slot), zero-pad seq and K.
        patches = jnp.pad(patches, ((0, 0), (1, S_pad - S), (0, K_pad - K)))
        # Flatten (B, S_pad) -> M so each grid step is one plain 2-D matmul.
        patches = patches.reshape(B * S_pad, K_pad)

        grid = (B, s_blocks)
        out = pl.pallas_call(
            _vision_embed_kernel,
            out_shape=jax.ShapeDtypeStruct((B * S_pad, N_pad), x.dtype),
            grid_spec=pltpu.PrefetchScalarGridSpec(
                num_scalar_prefetch=0,
                grid=grid,
                in_specs=[
                    pl.BlockSpec((ts, K_pad), lambda b, s: (b * s_blocks + s, 0)),
                    pl.BlockSpec((K_pad, N_pad), lambda b, s: (0, 0)),
                    pl.BlockSpec((ts, N_pad), lambda b, s: (s, 0)),
                ],
                out_specs=pl.BlockSpec((ts, N_pad),
                                       lambda b, s: (b * s_blocks + s, 0)),
            ),
            compiler_params=pltpu.CompilerParams(
                dimension_semantics=("parallel", "parallel"),
                vmem_limit_bytes=32 * 1024 * 1024,
            ),
        )(patches, w2, add)

        # TODO(synk): hidden_dropout is identity at inference; training-mode
        # dropout (pltpu.prng_*) not implemented.
        return out.reshape(B, S_pad, N_pad)[:, :S, :hidden]

    return jax.jit(forward)


if __name__ == "__main__":
    config = dict(image_size=16, patch_size=4, num_channels=4, hidden_size=32,
                  hidden_dropout=0.0, position_method="random")
    B = 2
    C = config["num_channels"]
    H = config["image_size"]
    P = config["patch_size"]
    hidden = config["hidden_size"]
    num_patches = (H // P) ** 2

    key = jax.random.PRNGKey(0)
    kx, kw, kb, kc, kp = jax.random.split(key, 5)
    x = jax.random.normal(kx, (B, C, H, H), dtype=jnp.float32)
    weight = jax.random.normal(kw, (hidden, C, P, P), dtype=jnp.float32) * 0.02
    bias = jax.random.normal(kb, (hidden,), dtype=jnp.float32) * 0.02
    cls_token = jax.random.normal(kc, (1, 1, hidden), dtype=jnp.float32)
    # position_method == 'random'
    pos_emb = jax.random.normal(kp, (1, num_patches + 1, hidden), dtype=jnp.float32)

    forward = make_vision_embedding(weight, bias, cls_token, pos_emb, P)
    out = jax.block_until_ready(forward(x))
    assert out.shape == (B, num_patches + 1, hidden)

    # Reference: plain-JAX strided conv + cls concat + positional add (f32).
    ref = jax.lax.conv_general_dilated(
        x, weight, window_strides=(P, P), padding="VALID",
        dimension_numbers=("NCHW", "OIHW", "NCHW"))
    ref = ref + bias.reshape(1, hidden, 1, 1)
    ref = ref.reshape(B, hidden, num_patches).transpose(0, 2, 1)
    ref = jnp.concatenate([jnp.broadcast_to(cls_token, (B, 1, hidden)), ref], axis=1)
    ref = ref + pos_emb

    # bf16 operands with f32 accumulation -> loosened tolerance vs f32 reference.
    err = float(jnp.max(jnp.abs(out - ref)))
    assert jnp.allclose(out, ref, atol=3e-2, rtol=3e-2), err

    print("KERNEL_OK")
</pallas_src>

<mosaic_0001>
module attributes {stable_mosaic.version = 11 : i64} {
  func.func @_vision_embed_kernel(%arg0: i32, %arg1: i32, %arg2: memref<24x128xbf16, #tpu.memory_space<vmem>>, %arg3: memref<128x128xbf16, #tpu.memory_space<vmem>>, %arg4: memref<24x128xf32, #tpu.memory_space<vmem>>, %arg5: memref<24x128xf32, #tpu.memory_space<vmem>>) attributes {dimension_semantics = [#tpu.dimension_semantics<parallel>, #tpu.dimension_semantics<parallel>], iteration_bounds = array<i64: 2, 1>, scalar_prefetch = 0 : i64, scratch_operands = 0 : i64, tpu.core_type = #tpu.core_type<tc>, window_params = [{transform_indices = @transform_0, window_bounds = array<i64: 24, 128>}, {pipeline_mode = #tpu.pipeline_mode<synchronous>, transform_indices = @transform_1, window_bounds = array<i64: 128, 128>}, {transform_indices = @transform_2, window_bounds = array<i64: 24, 128>}, {transform_indices = @transform_3, window_bounds = array<i64: 24, 128>}]} {
    %c0 = arith.constant 0 : index
    %c0_0 = arith.constant 0 : index
    %0 = vector.load %arg2[%c0, %c0_0] : memref<24x128xbf16, #tpu.memory_space<vmem>>, vector<24x128xbf16>
    %c0_1 = arith.constant 0 : index
    %c0_2 = arith.constant 0 : index
    %1 = vector.load %arg3[%c0_1, %c0_2] : memref<128x128xbf16, #tpu.memory_space<vmem>>, vector<128x128xbf16>
    %cst = arith.constant dense<0.000000e+00> : vector<24x128xf32>
    %2 = tpu.matmul %0, %1, %cst {dimension_numbers = #tpu.dot_dimension_numbers<[1], [0], [0], [1], [0, 0, 1, 1], [], []>} : vector<24x128xbf16>, vector<128x128xbf16>, vector<24x128xf32> -> vector<24x128xf32>
    %c0_3 = arith.constant 0 : index
    %c0_4 = arith.constant 0 : index
    %3 = vector.load %arg4[%c0_3, %c0_4] : memref<24x128xf32, #tpu.memory_space<vmem>>, vector<24x128xf32>
    %4 = arith.addf %2, %3 : vector<24x128xf32>
    %c0_5 = arith.constant 0 : index
    %c0_6 = arith.constant 0 : index
    %5 = vector.load %arg5[%c0_5, %c0_6] : memref<24x128xf32, #tpu.memory_space<vmem>>, vector<24x128xf32>
    tpu.vector_store %arg5[%c0_5, %c0_6], %4 {strides = array<i32>} : memref<24x128xf32, #tpu.memory_space<vmem>>, vector<24x128xf32>,
    return
  }
  func.func @transform_0(%arg0: i32, %arg1: i32) -> (i32, i32) {
    %c1_i32 = arith.constant 1 : i32
    %0 = arith.muli %arg0, %c1_i32 : i32
    %1 = arith.addi %0, %arg1 : i32
    %c0_i32 = arith.constant 0 : i32
    %c0_i32_0 = arith.constant 0 : i32
    return %1, %c0_i32 : i32, i32
  }
  func.func @transform_1(%arg0: i32, %arg1: i32) -> (i32, i32) {
    %c0_i32 = arith.constant 0 : i32
    %c0_i32_0 = arith.constant 0 : i32
    %c0_i32_1 = arith.constant 0 : i32
    return %c0_i32, %c0_i32_0 : i32, i32
  }
  func.func @transform_2(%arg0: i32, %arg1: i32) -> (i32, i32) {
    %c0_i32 = arith.constant 0 : i32
    %c0_i32_0 = arith.constant 0 : i32
    return %arg1, %c0_i32 : i32, i32
  }
  func.func @transform_3(%arg0: i32, %arg1: i32) -> (i32, i32) {
    %c1_i32 = arith.constant 1 : i32
    %0 = arith.muli %arg0, %c1_i32 : i32
    %1 = arith.addi %0, %arg1 : i32
    %c0_i32 = arith.constant 0 : i32
    %c0_i32_0 = arith.constant 0 : i32
    return %1, %c0_i32 : i32, i32
  }
}

</mosaic_0001>

<llo_original>
// kernel: forward.1
$region0: #{forward.1}
  #allocation0 [shape = 'u32[]', space=smem, size = 0x4, offset = 0x4, fixed_abs, tag = 'smem constant byte address 0x4 - core index']
  #allocation1 [shape = 'u32[144,128]{1,0:T(1,128)}', space=vmem, size = 0x12000, scoped, tag = 'internal scratch']
  %s0 = inlined_call_operand.vmem [shape: bf16[48,128], index: 0, kind: input, shape index: {}]
  %s1 = inlined_call_operand.vmem [shape: bf16[128,128], index: 1, kind: input, shape index: {}]
  %s2 = inlined_call_operand.vmem [shape: f32[24,128], index: 2, kind: input, shape index: {}]
  %s3 = inlined_call_operand.vmem [shape: f32[48,128], index: 3, kind: output, shape index: {}]
  %s4 = sld [smem:[#allocation0]]
  $region45: #{forward.1} parent=0
    _
  %s6 = ssub.s32 1, %s4
  %s7 = scalar_select 0, %s6, %s4
  loop: start=0, step=1, limit=4
  $region2: #{forward.1} parent=0 // loop_pre_header
    _
  $region3: #{forward.1} parent=0 // loop_header
    %s9 = sphi 0, %s13
    %p10 = scmp.ge.s32.totalorder %s9, 4
    %s16 = sphi 0, %s28
    %s17 = sphi 0, %s24
    %s18 = sphi 0, %s16
    %s19 = sphi 0, %s17
    %s20 = sphi 0, %s18
    %s21 = sphi 0, %s19
    %s33 = sphi 0, %s35
    %s36 = sphi 0, %s33
    %s37 = sphi 0, %s36
    %s53 = sphi 0, %s37
    %s57 = sphi 0, %s57
    %s59 = sphi 0, %s57
    %s60 = sphi 0, %s59
    %s74 = sphi 0, %s60
    %s80 = sphi 0, %s82
    %s83 = sphi 0, %s80
    %s84 = sphi 0, %s83
    %s100 = sphi 0, %s84
    %s108 = sphi 0, %s110
    %s111 = sphi 0, %s108
    %s112 = sphi 0, %s111
    %s128 = sphi 0, %s112
  $region4: #{forward.1} parent=0 // loop_header_branch
    %12 = sbr.rel (%p10) target = $region8
  $region5: #{forward.1} parent=0 // loop_body
    %s14 = ssub.s32 %s9, 1
    %s15 = ssub.s32 %s9, 2
    %s22 = sadd.s32 1, %s17
    %p23 = scmp.ge.s32.totalorder %s22, 1
    %s24 = scalar_select %p23, 0, %s22
    %s25 = sadd.s32 1, %s16
    %s26 = scalar_select %p23, %s25, %s16
    %p27 = scmp.ge.s32.totalorder %s26, 2
    %s28 = scalar_select %p27, 0, %s26
    %s29 = sadd.s32 %s16, %s17
    %s30 = sadd.s32 %s28, %s24
    %s31 = ssub.s32 %s29, %s30
    %p32 = scmp.eq.s32.totalorder %s31, 0
    %s34 = sadd.s32 %s33, 1
    %s35 = scalar_select %p32, %s33, %s34
    %p38 = pneg %p32
    %p39 = scmp.eq.s32.totalorder %s9, 1
    %p40 = por %p38, %p39
    %p41 = scmp.ne.s32.totalorder %s33, %s36
    %p42 = scmp.eq.s32.totalorder %s9, 0
    %p43 = por %p41, %p42
    %p44 = scmp.ne.s32.totalorder %s33, %s36
    %p45 = scmp.eq.s32.totalorder %s14, 1
    %p46 = por %p44, %p45
    %p47 = scmp.ne.s32.totalorder %s36, %s37
    %p48 = scmp.eq.s32.totalorder %s14, 0
    %p49 = por %p47, %p48
    %p50 = scmp.ne.s32.totalorder %s36, %s37
    %p51 = scmp.eq.s32.totalorder %s15, 1
    %p52 = por %p50, %p51
    %p54 = scmp.ne.s32.totalorder %s37, %s53
    %p55 = scmp.eq.s32.totalorder %s15, 0
    %p56 = por %p54, %p55
    %s58 = sadd.s32 %s57, 1
    %p61 = scmp.eq.s32.totalorder %s9, 1
    %p62 = scmp.ne.s32.totalorder %s57, %s59
    %p63 = scmp.eq.s32.totalorder %s9, 0
    %p64 = por %p62, %p63
    %p65 = scmp.ne.s32.totalorder %s57, %s59
    %p66 = scmp.eq.s32.totalorder %s14, 1
    %p67 = por %p65, %p66
    %p68 = scmp.ne.s32.totalorder %s59, %s60
    %p69 = scmp.eq.s32.totalorder %s14, 0
    %p70 = por %p68, %p69
    %p71 = scmp.ne.s32.totalorder %s59, %s60
    %p72 = scmp.eq.s32.totalorder %s15, 1
    %p73 = por %p71, %p72
    %p75 = scmp.ne.s32.totalorder %s60, %s74
    %p76 = scmp.eq.s32.totalorder %s15, 0
    %p77 = por %p75, %p76
    %s78 = ssub.s32 %s17, %s24
    %p79 = scmp.eq.s32.totalorder %s78, 0
    %s81 = sadd.s32 %s80, 1
    %s82 = scalar_select %p79, %s80, %s81
    %p85 = pneg %p79
    %p86 = scmp.eq.s32.totalorder %s9, 1
    %p87 = por %p85, %p86
    %p88 = scmp.ne.s32.totalorder %s80, %s83
    %p89 = scmp.eq.s32.totalorder %s9, 0
    %p90 = por %p88, %p89
    %p91 = scmp.ne.s32.totalorder %s80, %s83
    %p92 = scmp.eq.s32.totalorder %s14, 1
    %p93 = por %p91, %p92
    %p94 = scmp.ne.s32.totalorder %s83, %s84
    %p95 = scmp.eq.s32.totalorder %s14, 0
    %p96 = por %p94, %p95
    %p97 = scmp.ne.s32.totalorder %s83, %s84
    %p98 = scmp.eq.s32.totalorder %s15, 1
    %p99 = por %p97, %p98
    %p101 = scmp.ne.s32.totalorder %s84, %s100
    %p102 = scmp.eq.s32.totalorder %s15, 0
    %p103 = por %p101, %p102
    %s104 = sadd.s32 %s16, %s17
    %s105 = sadd.s32 %s28, %s24
    %s106 = ssub.s32 %s104, %s105
    %p107 = scmp.eq.s32.totalorder %s106, 0
    %s109 = sadd.s32 %s108, 1
    %s110 = scalar_select %p107, %s108, %s109
    %p113 = pneg %p107
    %p114 = scmp.eq.s32.totalorder %s9, 1
    %p115 = por %p113, %p114
    %p116 = scmp.ne.s32.totalorder %s108, %s111
    %p117 = scmp.eq.s32.totalorder %s9, 0
    %p118 = por %p116, %p117
    %p119 = scmp.ne.s32.totalorder %s108, %s111
    %p120 = scmp.eq.s32.totalorder %s14, 1
    %p121 = por %p119, %p120
    %p122 = scmp.ne.s32.totalorder %s111, %s112
    %p123 = scmp.eq.s32.totalorder %s14, 0
    %p124 = por %p122, %p123
    %p125 = scmp.ne.s32.totalorder %s111, %s112
    %p126 = scmp.eq.s32.totalorder %s15, 1
    %p127 = por %p125, %p126
    %p129 = scmp.ne.s32.totalorder %s112, %s128
    %p130 = scmp.eq.s32.totalorder %s15, 0
    %p131 = por %p129, %p130
    %p132 = scmp.le.s32.totalorder 1, %s9
    %p133 = scmp.lt.s32.totalorder %s9, 3
    %p134 = pnand %p132, %p133
    %p135 = pneg %p134
    // Predicated region
    $region9: #{forward.1} parent=5 // pred_check
      _
    $region10: #{forward.1} parent=5 // pred_check_branch
      %137 = sbr.rel (%p134) target = $region12
    $region11: #{forward.1} parent=5 // pred_region
      %s138 = ssub.s32 %s9, 1
      // Predicated region
      $region13: #{forward.1} parent=11 // pred_check
        %p139 = pneg %p70
      $region14: #{forward.1} parent=11 // pred_check_branch
        %141 = sbr.rel (%p139) target = $region16
      $region15: #{forward.1} parent=11 // pred_region
        _
      $region16: #{forward.1} parent=11 // pred_fallthru
        _
      // Predicated region
      $region17: #{forward.1} parent=11 // pred_check
        %p142 = pneg %p96
      $region18: #{forward.1} parent=11 // pred_check_branch
        %144 = sbr.rel (%p142) target = $region20
      $region19: #{forward.1} parent=11 // pred_region
        %s145 = smul.u32 3, %s19
        %p146 = scmp.lt.s32.totalorder %s145, 2
        %s147 = scalar_select %p146, %s145, 2
        %s148 = smul.addr %s147, 8
        %s149 = scalar_lea.vmem %s2, %s148
        %s150 = smul.u32 3, %s19
      $region20: #{forward.1} parent=11 // pred_fallthru
        _
    $region12: #{forward.1} parent=5 // pred_fallthru
      _
    %p151 = scmp.lt.s32.totalorder %s9, 2
    // Predicated region
    $region21: #{forward.1} parent=5 // pred_check
      %p152 = pneg %p151
    $region22: #{forward.1} parent=5 // pred_check_branch
      %154 = sbr.rel (%p152) target = $region24
    $region23: #{forward.1} parent=5 // pred_region
      // Predicated region
      $region25: #{forward.1} parent=23 // pred_check
        %p155 = pneg %p43
      $region26: #{forward.1} parent=23 // pred_check_branch
        %157 = sbr.rel (%p155) target = $region28
      $region27: #{forward.1} parent=23 // pred_region
        %s158 = sadd.s32 %s16, %s17
        %s159 = smul.u32 3, %s158
        %p160 = scmp.lt.s32.totalorder %s159, 5
        %s161 = scalar_select %p160, %s159, 5
        %s162 = smul.addr %s161, 4
        %s163 = scalar_lea.vmem %s0, %s162
        %s164 = sadd.s32 %s16, %s17
        %s165 = smul.u32 3, %s164
      $region28: #{forward.1} parent=23 // pred_fallthru
        _
    $region24: #{forward.1} parent=5 // pred_fallthru
      _
    %p166 = scmp.le.s32.totalorder 1, %s9
    %p167 = scmp.lt.s32.totalorder %s9, 3
    %p168 = pnand %p166, %p167
    %p169 = pneg %p168
    // Predicated region
    $region29: #{forward.1} parent=5 // pred_check
      _
    $region30: #{forward.1} parent=5 // pred_check_branch
      %171 = sbr.rel (%p168) target = $region32
    $region31: #{forward.1} parent=5 // pred_region
      %s172 = ssub.s32 %s9, 1
      %s173 = sadd.s32 %s18, %s19
      %s174 = smul.u32 3, %s173
      %p175 = scmp.lt.s32.totalorder %s174, 5
      %s176 = scalar_select %p175, %s174, 5
      %s177 = smul.addr %s176, 4
      %s178 = scalar_lea.vmem %s0, %s177
      %p179 = pneg %p49
      %p180 = pneg %p46
      %p181 = pneg %p70
      %p182 = pneg %p67
      %s183 = smul.u32 3, %s19
      %p184 = scmp.lt.s32.totalorder %s183, 2
      %s185 = scalar_select %p184, %s183, 2
      %s186 = smul.addr %s185, 8
      %s187 = scalar_lea.vmem %s2, %s186
      %p188 = pneg %p96
      %p189 = pneg %p93
      %p190 = pneg %p124
      %p191 = pneg %p121
      %s192 = sadd.s32 %s18, %s19
      %s193 = smul.u32 3, %s192
      %p194 = scmp.lt.s32.totalorder %s193, 5
      %s195 = scalar_select %p194, %s193, 5
      %s196 = smul.addr %s195, 8
      %s197 = scalar_lea.vmem %s3, %s196
      %s198 = sadd.s32 %s18, %s19
      %s199 = smul.u32 3, %s198
      %p200 = scmp.lt.s32.totalorder %s199, 5
      %s201 = scalar_select %p200, %s199, 5
      %s202 = smul.addr %s201, 4
      %s203 = scalar_lea.vmem %s0, %s202
      %s204 = sadd.s32 %s18, %s19
      %s205 = smul.u32 3, %s204
      %s206 = smul.u32 3, %s19
      %p207 = scmp.lt.s32.totalorder %s206, 2
      %s208 = scalar_select %p207, %s206, 2
      %s209 = smul.addr %s208, 8
      %s210 = scalar_lea.vmem %s2, %s209
      %s211 = smul.u32 3, %s19
      %s212 = sadd.s32 %s18, %s19
      %s213 = smul.u32 3, %s212
      %p214 = scmp.lt.s32.totalorder %s213, 5
      %s215 = scalar_select %p214, %s213, 5
      %s216 = smul.addr %s215, 8
      %s217 = scalar_lea.vmem %s3, %s216
      %s218 = sadd.s32 %s18, %s19
      %s219 = smul.u32 3, %s218
      %v221 = vld [vmem:[%s203] sm:$0xf]
      %v222 = vld [vmem:[%s203 + $0x4] sm:$0xf]
      %v223 = vld [vmem:[%s203 + $0x8] sm:$0xf]
      %v224 = vld [vmem:[%s1] sm:$0xf]
      %v225 = vld [vmem:[%s1 + $0x4] sm:$0xf]
      %v226 = vld [vmem:[%s1 + $0x8] sm:$0xf]
      %v227 = vld [vmem:[%s1 + $0xc] sm:$0xf]
      %v228 = vld [vmem:[%s1 + $0x10] sm:$0xf]
      %v229 = vld [vmem:[%s1 + $0x14] sm:$0xf]
      %v230 = vld [vmem:[%s1 + $0x18] sm:$0xf]
      %v231 = vld [vmem:[%s1 + $0x1c] sm:$0xf]
      %v232 = vld [vmem:[%s1 + $0x20] sm:$0xf]
      %v233 = vld [vmem:[%s1 + $0x24] sm:$0xf]
      %v234 = vld [vmem:[%s1 + $0x28] sm:$0xf]
      %v235 = vld [vmem:[%s1 + $0x2c] sm:$0xf]
      %v236 = vld [vmem:[%s1 + $0x30] sm:$0xf]
      %v237 = vld [vmem:[%s1 + $0x34] sm:$0xf]
      %v238 = vld [vmem:[%s1 + $0x38] sm:$0xf]
      %v239 = vld [vmem:[%s1 + $0x3c] sm:$0xf]
      %v240 = vld [vmem:[%s210] sm:$0xff]
      %v241 = vld [vmem:[%s210 + $0x8] sm:$0xff]
      %v242 = vld [vmem:[%s210 + $0x10] sm:$0xff]
      %v246 = vunpack.c.l.b16 %v221
      %v247 = vunpack.c.l.b16 %v222
      %v248 = vunpack.c.l.b16 %v223
      %v249 = vpack.c.b16 %v247, %v246
      %v250 = vpack.c.b16 %v248, %v248
      %v269 = vunpack.c.l.b16 %v224
      %v270 = vunpack.c.l.b16 %v225
      %v271 = vunpack.c.l.b16 %v226
      %v272 = vunpack.c.l.b16 %v227
      %v273 = vunpack.c.l.b16 %v228
      %v274 = vunpack.c.l.b16 %v229
      %v275 = vunpack.c.l.b16 %v230
      %v276 = vunpack.c.l.b16 %v231
      %v277 = vunpack.c.l.b16 %v232
      %v278 = vunpack.c.l.b16 %v233
      %v279 = vunpack.c.l.b16 %v234
      %v280 = vunpack.c.l.b16 %v235
      %v281 = vunpack.c.l.b16 %v236
      %v282 = vunpack.c.l.b16 %v237
      %v283 = vunpack.c.l.b16 %v238
      %v284 = vunpack.c.l.b16 %v239
      %v285 = vpack.c.b16 %v270, %v269
      %v286 = vpack.c.b16 %v272, %v271
      %v287 = vpack.c.b16 %v274, %v273
      %v288 = vpack.c.b16 %v276, %v275
      %v289 = vpack.c.b16 %v278, %v277
      %v290 = vpack.c.b16 %v280, %v279
      %v291 = vpack.c.b16 %v282, %v281
      %v292 = vpack.c.b16 %v284, %v283
      %301 = vmatprep.subr.bf16.mxu0 0
      %302 = vmatpush1.bf16.msra.mxu0 %v285
      %303 = vmatprep.subr.bf16.mxu0 0
      %304 = vmatpush1.bf16.msra.mxu0 %v286
      %305 = vmatprep.subr.bf16.mxu0 0
      %306 = vmatpush1.bf16.msra.mxu0 %v287
      %307 = vmatprep.subr.bf16.mxu0 0
      %308 = vmatpush1.bf16.msra.mxu0 %v288
      %309 = vmatprep.subr.bf16.mxu0 0
      %310 = vmatpush1.bf16.msra.mxu0 %v289
      %311 = vmatprep.subr.bf16.mxu0 0
      %312 = vmatpush1.bf16.msra.mxu0 %v290
      %313 = vmatprep.subr.bf16.mxu0 0
      %314 = vmatpush1.bf16.msra.mxu0 %v291
      %315 = vmatprep.subr.bf16.mxu0 0
      %316 = vmatpush1.bf16.msra.mxu0 %v292
      %317 = vmatprep.subr.bf16.mxu0 0
      %318 = vmatpush1.bf16.msra.mxu0 0
      %319 = vmatprep.subr.bf16.mxu0 0
      %320 = vmatpush1.bf16.msra.mxu0 0
      %321 = vmatprep.subr.bf16.mxu0 0
      %322 = vmatpush1.bf16.msra.mxu0 0
      %323 = vmatprep.subr.bf16.mxu0 0
      %324 = vmatpush1.bf16.msra.mxu0 0
      %325 = vmatprep.subr.bf16.mxu0 0
      %326 = vmatpush1.bf16.msra.mxu0 0
      %327 = vmatprep.subr.bf16.mxu0 0
      %328 = vmatpush1.bf16.msra.mxu0 0
      %329 = vmatprep.subr.bf16.mxu0 0
      %330 = vmatpush1.bf16.msra.mxu0 0
      %331 = vmatprep.subr.bf16.mxu0 0
      %332 = vmatpush1.bf16.msra.mxu0 0
      %333 = vmatprep.mubr.bf16.mxu0 0
      %334 = vmatmul.mubr.bf16.gmra.mrb[0].mxu0 %v249
      %v335 = vpop.f32.mrb[0].mxu0
      %v336 = vadd.f32 %v240, %v335
      %v337 = vpop.f32.mrb[0].mxu0
      %v338 = vpop.f32.mrb[0].mxu0
      %v339 = vadd.f32 %v241, %v338
      %v340 = vpop.f32.mrb[0].mxu0
      %341 = vmatprep.mubr.bf16.mxu0 0
      %342 = vmatmul.mubr.bf16.gmra.mrb[0].mxu0 %v250
      %v343 = vpop.f32.mrb[0].mxu0
      %v344 = vadd.f32 %v242, %v343
      %v345 = vpop.f32.mrb[0].mxu0
      %v346 = vpop.f32.mrb[0].mxu0
      %v347 = vpop.f32.mrb[0].mxu0
      %348 = vdwg.mxu0
      %349 = vst [vmem:[%s217] sm:$0xff] %v336
      %350 = vst [vmem:[%s217 + $0x8] sm:$0xff] %v339
      %351 = vst [vmem:[%s217 + $0x10] sm:$0xff] %v344
      %s352 = sadd.s32 %s18, %s19
      %s353 = smul.u32 3, %s352
      %p354 = scmp.lt.s32.totalorder %s353, 5
      %s355 = scalar_select %p354, %s353, 5
      %s356 = smul.addr %s355, 8
      %s357 = scalar_lea.vmem %s3, %s356
      // Predicated region
      $region33: #{forward.1} parent=31 // pred_check
        %p358 = pneg %p121
      $region34: #{forward.1} parent=31 // pred_check_branch
        %360 = sbr.rel (%p358) target = $region36
      $region35: #{forward.1} parent=31 // pred_region
        %s361 = sadd.s32 %s18, %s19
        %s362 = smul.u32 3, %s361
      $region36: #{forward.1} parent=31 // pred_fallthru
        _
    $region32: #{forward.1} parent=5 // pred_fallthru
      _
    %p363 = scmp.le.s32.totalorder 2, %s9
    // Predicated region
    $region37: #{forward.1} parent=5 // pred_check
      %p364 = pneg %p363
    $region38: #{forward.1} parent=5 // pred_check_branch
      %366 = sbr.rel (%p364) target = $region40
    $region39: #{forward.1} parent=5 // pred_region
      %s367 = ssub.s32 %s9, 2
      // Predicated region
      $region41: #{forward.1} parent=39 // pred_check
        %p368 = pneg %p127
      $region42: #{forward.1} parent=39 // pred_check_branch
        %370 = sbr.rel (%p368) target = $region44
      $region43: #{forward.1} parent=39 // pred_region
        %s371 = sadd.s32 %s20, %s21
        %s372 = smul.u32 3, %s371
        %p373 = scmp.lt.s32.totalorder %s372, 5
        %s374 = scalar_select %p373, %s372, 5
        %s375 = smul.addr %s374, 8
        %s376 = scalar_lea.vmem %s3, %s375
      $region44: #{forward.1} parent=39 // pred_fallthru
        _
    $region40: #{forward.1} parent=5 // pred_fallthru
      _
  $region6: #{forward.1} parent=0 // loop_footer
    %s13 = sadd.s32 1, %s9
  $region7: #{forward.1} parent=0 // loop_footer_branch
    %8 = sbr.rel target = $region3
  $region8: #{forward.1} parent=0 // loop_exit
    _

</llo_original>
